<compile_context>
chip_gen: v6e
topology: v6e:2x2x1
jax: 0.10.0
libtpu: 0.0.40
codegen_flags: <defaults>
</compile_context>

<pallas_src>
import math
from functools import partial

import jax
import jax.numpy as jnp
from jax import lax
from jax.experimental import pallas as pl
from jax.experimental.pallas import tpu as pltpu

LANE = 128


def _round_up(n, m):
    return ((n + m - 1) // m) * m


def _fused_heads_kernel(x_ref, w1_ref, b1_ref, w2_ref, b2_ref,
                        out_ref, probs_ref, *, action_dim, logit_offset):
    x = x_ref[...]
    # Packed first layer for all three heads on the MXU; f32 accumulation.
    h = jnp.dot(x, w1_ref[...], preferred_element_type=jnp.float32)
    h = jnp.maximum(h + b1_ref[...], 0.0)                 # bias + ReLU on VPU
    # Packed (block-diagonal) second layer: lanes 0=q, 1=v, 2:2+A = pi logits.
    o = jnp.dot(h, w2_ref[...], preferred_element_type=jnp.float32)
    o = o + b2_ref[...]

    lane = lax.broadcasted_iota(jnp.int32, o.shape, 1)
    logit_mask = jnp.logical_and(lane >= logit_offset,
                                 lane < logit_offset + action_dim)

    # NaN guard (torch semantics: zero the action logits if any NaN appears).
    has_nan = jnp.any(jnp.logical_and(jnp.isnan(o), logit_mask))
    o = jnp.where(jnp.logical_and(logit_mask, has_nan), 0.0, o)
    out_ref[...] = o                                       # lane-dense store

    # Masked, lane-dense softmax over the action-logit lanes only.
    masked = jnp.where(logit_mask, o, -jnp.inf)
    m = jnp.max(masked, axis=-1, keepdims=True)
    p = jnp.exp(masked - m)                                # non-logit lanes -> 0
    denom = jnp.sum(p, axis=-1, keepdims=True)
    probs_ref[...] = p / denom


def incontext_q_heads(zsa, packed, *, action_dim, block_rows=128):
    """zsa: (B, dim) f32 packed: dict of packed weights. Returns dict of heads."""
    B, dim = zsa.shape
    w1p, b1p, w2p, b2p = packed["w1p"], packed["b1p"], packed["w2p"], packed["b2p"]
    hp = w1p.shape[1]
    out_pad = w2p.shape[1]
    logit_offset = 2

    # Batch tile: multiple of 8 sublanes; pad B up to a whole number of tiles.
    tb = min(block_rows, _round_up(B, 8))
    bp = _round_up(B, tb)
    zsa_in = zsa if bp == B else jnp.zeros((bp, dim), zsa.dtype).at[:B].set(zsa)

    flops = 2 * bp * (dim * hp + hp * out_pad)
    bytes_accessed = 4 * (bp * dim + dim * hp + hp + hp * out_pad + out_pad
                          + 2 * bp * out_pad)

    out, probs = pl.pallas_call(
        partial(_fused_heads_kernel, action_dim=action_dim,
                logit_offset=logit_offset),
        out_shape=(jax.ShapeDtypeStruct((bp, out_pad), jnp.float32),
                   jax.ShapeDtypeStruct((bp, out_pad), jnp.float32)),
        grid_spec=pltpu.PrefetchScalarGridSpec(
            num_scalar_prefetch=0,
            grid=(bp // tb,),
            in_specs=[
                pl.BlockSpec((tb, dim), lambda i: (i, 0)),      # streamed rows
                pl.BlockSpec((dim, hp), lambda i: (0, 0)),      # weight-resident
                pl.BlockSpec((1, hp), lambda i: (0, 0)),
                pl.BlockSpec((hp, out_pad), lambda i: (0, 0)),
                pl.BlockSpec((1, out_pad), lambda i: (0, 0)),
            ],
            out_specs=[
                pl.BlockSpec((tb, out_pad), lambda i: (i, 0)),
                pl.BlockSpec((tb, out_pad), lambda i: (i, 0)),
            ],
        ),
        compiler_params=pltpu.CompilerParams(
            dimension_semantics=("parallel",)),
        cost_estimate=pl.CostEstimate(
            flops=flops, transcendentals=bp * out_pad,
            bytes_accessed=bytes_accessed),
    )(zsa_in, w1p, b1p, w2p, b2p)

    out = out[:B]
    probs = probs[:B]
    return {
        "zsa": zsa,
        "q_value": out[:, 0:1],
        "state_value": out[:, 1:2],
        "action_logits": out[:, logit_offset:logit_offset + action_dim],
        "action_probs": probs[:, logit_offset:logit_offset + action_dim],
    }


def pack_head_params(q_p, v_p, pi_p, *, dim, hdim, action_dim):
    """Pack q/v/pi heads into one wide, lane-dense, block-diagonal MLP."""
    hp = _round_up(3 * hdim, LANE)
    out_pad = LANE  # q(1) + v(1) + logits(A) padded to one dense 128-lane slab

    w1p = jnp.zeros((dim, hp), jnp.float32)
    b1p = jnp.zeros((1, hp), jnp.float32)
    w2p = jnp.zeros((hp, out_pad), jnp.float32)
    b2p = jnp.zeros((1, out_pad), jnp.float32)

    col_starts = (0, 1, 2)  # output lanes: q -> 0, v -> 1, pi -> 2:2+A
    for idx, (p, col0) in enumerate(zip((q_p, v_p, pi_p), col_starts)):
        r0 = idx * hdim
        ncol = p["w2"].shape[1]
        w1p = w1p.at[:, r0:r0 + hdim].set(p["w1"])
        b1p = b1p.at[0, r0:r0 + hdim].set(p["b1"])
        w2p = w2p.at[r0:r0 + hdim, col0:col0 + ncol].set(p["w2"])
        b2p = b2p.at[0, col0:col0 + ncol].set(p["b2"])
    return {"w1p": w1p, "b1p": b1p, "w2p": w2p, "b2p": b2p}


def xavier_uniform(key, fan_in, fan_out, dtype=jnp.float32):
    """Matches torch.nn.init.xavier_uniform_ (gain=1); returns (fan_in, fan_out)."""
    limit = math.sqrt(6.0 / (fan_in + fan_out))
    w = jax.random.uniform(key, (fan_out, fan_in), dtype, -limit, limit)
    return w.T


def make_head(key, dim, hdim, out_dim, zero_bias):
    k1, k2, k3, k4 = jax.random.split(key, 4)
    w1 = xavier_uniform(k1, dim, hdim)
    w2 = xavier_uniform(k2, hdim, out_dim)
    if zero_bias:  # PolicyHead._init_weights: zero biases
        b1 = jnp.zeros((hdim,), jnp.float32)
        b2 = jnp.zeros((out_dim,), jnp.float32)
    else:          # q/v heads: small uniform biases (torch default-style)
        b1 = jax.random.uniform(k3, (hdim,), jnp.float32,
                                -1.0 / math.sqrt(dim), 1.0 / math.sqrt(dim))
        b2 = jax.random.uniform(k4, (out_dim,), jnp.float32,
                                -1.0 / math.sqrt(hdim), 1.0 / math.sqrt(hdim))
    return {"w1": w1, "b1": b1, "w2": w2, "b2": b2}


def _ref_head(x, p):
    h = jnp.maximum(x @ p["w1"] + p["b1"], 0.0)
    return h @ p["w2"] + p["b2"]


if __name__ == "__main__":
    dim, hdim, action_dim = 128, 64, 3
    batch = 256  # amortizes launch overhead; 2 x 128-row tiles on the grid

    key = jax.random.PRNGKey(0)
    kx, kq, kv, kpi = jax.random.split(key, 4)

    q_params = make_head(kq, dim, hdim, 1, zero_bias=False)          # MLP head
    v_params = make_head(kv, dim, hdim, 1, zero_bias=False)          # ExpectileHead
    pi_params = make_head(kpi, dim, hdim, action_dim, zero_bias=True)  # PolicyHead

    packed = pack_head_params(q_params, v_params, pi_params,
                              dim=dim, hdim=hdim, action_dim=action_dim)

    zsa = jax.random.normal(kx, (batch, dim), jnp.float32)

    out = incontext_q_heads(zsa, packed, action_dim=action_dim)
    out = jax.block_until_ready(out)

    # Pure-JAX reference of the same forward semantics.
    q_ref = _ref_head(zsa, q_params)
    v_ref = _ref_head(zsa, v_params)
    logits_ref = _ref_head(zsa, pi_params)
    probs_ref = jax.nn.softmax(logits_ref, axis=-1)

    assert out["q_value"].shape == (batch, 1)
    assert out["state_value"].shape == (batch, 1)
    assert out["action_logits"].shape == (batch, action_dim)
    assert out["action_probs"].shape == (batch, action_dim)
    assert jnp.allclose(out["q_value"], q_ref, atol=1e-4, rtol=1e-4)
    assert jnp.allclose(out["state_value"], v_ref, atol=1e-4, rtol=1e-4)
    assert jnp.allclose(out["action_logits"], logits_ref, atol=1e-4, rtol=1e-4)
    assert jnp.allclose(out["action_probs"], probs_ref, atol=1e-4, rtol=1e-4)
    assert jnp.allclose(out["action_probs"].sum(-1), 1.0, atol=1e-5)

    print("KERNEL_OK")
</pallas_src>

<mosaic_0001>
module attributes {stable_mosaic.version = 11 : i64} {
  func.func @_fused_heads_kernel(%arg0: i32, %arg1: memref<128x128xf32, #tpu.memory_space<vmem>>, %arg2: memref<128x256xf32, #tpu.memory_space<vmem>>, %arg3: memref<1x256xf32, #tpu.memory_space<vmem>>, %arg4: memref<256x128xf32, #tpu.memory_space<vmem>>, %arg5: memref<1x128xf32, #tpu.memory_space<vmem>>, %arg6: memref<128x128xf32, #tpu.memory_space<vmem>>, %arg7: memref<128x128xf32, #tpu.memory_space<vmem>>) attributes {dimension_semantics = [#tpu.dimension_semantics<parallel>], iteration_bounds = array<i64: 2>, scalar_prefetch = 0 : i64, scratch_operands = 0 : i64, tpu.core_type = #tpu.core_type<tc>, window_params = [{transform_indices = @transform_0, window_bounds = array<i64: 128, 128>}, {pipeline_mode = #tpu.pipeline_mode<synchronous>, transform_indices = @transform_1, window_bounds = array<i64: 128, 256>}, {pipeline_mode = #tpu.pipeline_mode<synchronous>, transform_indices = @transform_2, window_bounds = array<i64: 1, 256>}, {pipeline_mode = #tpu.pipeline_mode<synchronous>, transform_indices = @transform_3, window_bounds = array<i64: 256, 128>}, {pipeline_mode = #tpu.pipeline_mode<synchronous>, transform_indices = @transform_4, window_bounds = array<i64: 1, 128>}, {transform_indices = @transform_5, window_bounds = array<i64: 128, 128>}, {transform_indices = @transform_6, window_bounds = array<i64: 128, 128>}]} {
    %c0 = arith.constant 0 : index
    %c0_0 = arith.constant 0 : index
    %0 = vector.load %arg1[%c0, %c0_0] : memref<128x128xf32, #tpu.memory_space<vmem>>, vector<128x128xf32>
    %c0_1 = arith.constant 0 : index
    %c0_2 = arith.constant 0 : index
    %1 = vector.load %arg2[%c0_1, %c0_2] : memref<128x256xf32, #tpu.memory_space<vmem>>, vector<128x256xf32>
    %cst = arith.constant dense<0.000000e+00> : vector<128x256xf32>
    %2 = tpu.matmul %0, %1, %cst {dimension_numbers = #tpu.dot_dimension_numbers<[1], [0], [0], [1], [0, 0, 1, 1], [], []>} : vector<128x128xf32>, vector<128x256xf32>, vector<128x256xf32> -> vector<128x256xf32>
    %c0_3 = arith.constant 0 : index
    %c0_4 = arith.constant 0 : index
    %3 = vector.load %arg3[%c0_3, %c0_4] : memref<1x256xf32, #tpu.memory_space<vmem>>, vector<1x256xf32>
    %4 = vector.broadcast %3 : vector<1x256xf32> to vector<128x256xf32>
    %5 = arith.addf %2, %4 : vector<128x256xf32>
    %cst_5 = arith.constant 0.000000e+00 : f32
    %6 = vector.broadcast %cst_5 : f32 to vector<128x256xf32>
    %7 = arith.maximumf %5, %6 : vector<128x256xf32>
    %c0_6 = arith.constant 0 : index
    %c0_7 = arith.constant 0 : index
    %8 = vector.load %arg4[%c0_6, %c0_7] : memref<256x128xf32, #tpu.memory_space<vmem>>, vector<256x128xf32>
    %cst_8 = arith.constant dense<0.000000e+00> : vector<128x128xf32>
    %9 = tpu.matmul %7, %8, %cst_8 {dimension_numbers = #tpu.dot_dimension_numbers<[1], [0], [0], [1], [0, 0, 1, 1], [], []>} : vector<128x256xf32>, vector<256x128xf32>, vector<128x128xf32> -> vector<128x128xf32>
    %c0_9 = arith.constant 0 : index
    %c0_10 = arith.constant 0 : index
    %10 = vector.load %arg5[%c0_9, %c0_10] : memref<1x128xf32, #tpu.memory_space<vmem>>, vector<1x128xf32>
    %11 = vector.broadcast %10 : vector<1x128xf32> to vector<128x128xf32>
    %12 = arith.addf %9, %11 : vector<128x128xf32>
    %13 = tpu.iota {dimensions = array<i32: 1>} : vector<128x128xi32>
    %c2_i32 = arith.constant 2 : i32
    %14 = vector.broadcast %c2_i32 : i32 to vector<128x128xi32>
    %15 = arith.cmpi sge, %13, %14 : vector<128x128xi32>
    %c5_i32 = arith.constant 5 : i32
    %16 = vector.broadcast %c5_i32 : i32 to vector<128x128xi32>
    %17 = arith.cmpi slt, %13, %16 : vector<128x128xi32>
    %18 = arith.andi %15, %17 : vector<128x128xi1>
    %19 = arith.cmpf one, %12, %12 : vector<128x128xf32>
    %20 = arith.andi %19, %18 : vector<128x128xi1>
    %cst_11 = arith.constant 1.000000e+00 : f32
    %cst_12 = arith.constant 0.000000e+00 : f32
    %21 = vector.broadcast %cst_11 : f32 to vector<128x128xf32>
    %22 = vector.broadcast %cst_12 : f32 to vector<128x128xf32>
    %23 = arith.select %20, %21, %22 : vector<128x128xi1>, vector<128x128xf32>
    %24 = vector.shape_cast %23 : vector<128x128xf32> to vector<1x128x128xf32>
    %cst_13 = arith.constant dense<0xFF800000> : vector<1xf32>
    %25 = vector.multi_reduction <maximumf>, %24, %cst_13 [1, 2] : vector<1x128x128xf32> to vector<1xf32>
    %26 = vector.shape_cast %25 : vector<1xf32> to vector<1x1x1xf32>
    %27 = vector.extract %26[0, 0, 0] : f32 from vector<1x1x1xf32>
    %cst_14 = arith.constant 0.000000e+00 : f32
    %28 = arith.cmpf ogt, %27, %cst_14 : f32
    %29 = vector.broadcast %28 : i1 to vector<128x128xi1>
    %30 = arith.andi %18, %29 : vector<128x128xi1>
    %cst_15 = arith.constant 0.000000e+00 : f32
    %31 = vector.broadcast %cst_15 : f32 to vector<128x128xf32>
    %32 = arith.select %30, %31, %12 : vector<128x128xi1>, vector<128x128xf32>
    %c0_16 = arith.constant 0 : index
    %c0_17 = arith.constant 0 : index
    %33 = vector.load %arg6[%c0_16, %c0_17] : memref<128x128xf32, #tpu.memory_space<vmem>>, vector<128x128xf32>
    tpu.vector_store %arg6[%c0_16, %c0_17], %32 {strides = array<i32>} : memref<128x128xf32, #tpu.memory_space<vmem>>, vector<128x128xf32>,
    %cst_18 = arith.constant 0xFF800000 : f32
    %34 = vector.broadcast %cst_18 : f32 to vector<128x128xf32>
    %35 = arith.select %18, %32, %34 : vector<128x128xi1>, vector<128x128xf32>
    %cst_19 = arith.constant dense<0xFF800000> : vector<128xf32>
    %36 = vector.multi_reduction <maximumf>, %35, %cst_19 [1] : vector<128x128xf32> to vector<128xf32>
    %37 = vector.shape_cast %36 : vector<128xf32> to vector<128x1xf32>
    %38 = vector.broadcast %37 : vector<128x1xf32> to vector<128x128xf32>
    %39 = arith.subf %35, %38 : vector<128x128xf32>
    %40 = math.exp %39 : vector<128x128xf32>
    %cst_20 = arith.constant dense<0.000000e+00> : vector<128xf32>
    %41 = vector.multi_reduction <add>, %40, %cst_20 [1] : vector<128x128xf32> to vector<128xf32>
    %42 = vector.shape_cast %41 : vector<128xf32> to vector<128x1xf32>
    %43 = vector.broadcast %42 : vector<128x1xf32> to vector<128x128xf32>
    %44 = arith.divf %40, %43 : vector<128x128xf32>
    %c0_21 = arith.constant 0 : index
    %c0_22 = arith.constant 0 : index
    %45 = vector.load %arg7[%c0_21, %c0_22] : memref<128x128xf32, #tpu.memory_space<vmem>>, vector<128x128xf32>
    tpu.vector_store %arg7[%c0_21, %c0_22], %44 {strides = array<i32>} : memref<128x128xf32, #tpu.memory_space<vmem>>, vector<128x128xf32>,
    return
  }
  func.func @transform_0(%arg0: i32) -> (i32, i32) {
    %c0_i32 = arith.constant 0 : i32
    %c0_i32_0 = arith.constant 0 : i32
    return %arg0, %c0_i32 : i32, i32
  }
  func.func @transform_1(%arg0: i32) -> (i32, i32) {
    %c0_i32 = arith.constant 0 : i32
    %c0_i32_0 = arith.constant 0 : i32
    %c0_i32_1 = arith.constant 0 : i32
    return %c0_i32, %c0_i32_0 : i32, i32
  }
  func.func @transform_2(%arg0: i32) -> (i32, i32) {
    %c0_i32 = arith.constant 0 : i32
    %c0_i32_0 = arith.constant 0 : i32
    %c0_i32_1 = arith.constant 0 : i32
    return %c0_i32, %c0_i32_0 : i32, i32
  }
  func.func @transform_3(%arg0: i32) -> (i32, i32) {
    %c0_i32 = arith.constant 0 : i32
    %c0_i32_0 = arith.constant 0 : i32
    %c0_i32_1 = arith.constant 0 : i32
    return %c0_i32, %c0_i32_0 : i32, i32
  }
  func.func @transform_4(%arg0: i32) -> (i32, i32) {
    %c0_i32 = arith.constant 0 : i32
    %c0_i32_0 = arith.constant 0 : i32
    %c0_i32_1 = arith.constant 0 : i32
    return %c0_i32, %c0_i32_0 : i32, i32
  }
  func.func @transform_5(%arg0: i32) -> (i32, i32) {
    %c0_i32 = arith.constant 0 : i32
    %c0_i32_0 = arith.constant 0 : i32
    return %arg0, %c0_i32 : i32, i32
  }
  func.func @transform_6(%arg0: i32) -> (i32, i32) {
    %c0_i32 = arith.constant 0 : i32
    %c0_i32_0 = arith.constant 0 : i32
    return %arg0, %c0_i32 : i32, i32
  }
}

</mosaic_0001>

<llo_original>
// kernel: tpu_custom_call.1
$region0: #{tpu_custom_call.1}
  #allocation0 [shape = 'u32[]', space=smem, size = 0x4, offset = 0x4, fixed_abs, tag = 'smem constant byte address 0x4 - core index']
  #allocation1 [shape = 'u32[144,128]{1,0:T(1,128)}', space=vmem, size = 0x12000, scoped, tag = 'internal scratch']
  %s0 = inlined_call_operand.hbm [shape: f32[256,128], index: 0, kind: input, shape index: {}]
  %s1 = inlined_call_operand.hbm [shape: f32[128,256], index: 1, kind: input, shape index: {}]
  %s2 = inlined_call_operand.vmem [shape: f32[1,256], index: 2, kind: input, shape index: {}]
  %s3 = inlined_call_operand.hbm [shape: f32[256,128], index: 3, kind: input, shape index: {}]
  %s4 = inlined_call_operand.vmem [shape: f32[1,128], index: 4, kind: input, shape index: {}]
  %s5 = inlined_call_operand.hbm [shape: f32[256,128], index: 5, kind: output, shape index: {0}]
  %s6 = inlined_call_operand.hbm [shape: f32[256,128], index: 6, kind: output, shape index: {1}]
  %7 = xla_tuple %s5, %s6
  %s8 = sld [smem:[#allocation0]]
  $region73: #{tpu_custom_call.1} parent=0
    _
  %s10 = ssub.s32 1, %s8
  %s11 = scalar_select 0, %s10, %s8
  $region1: #{tpu_custom_call.1} parent=0
    #allocation2 [shape = 'u8[131072]{0}', space=vmem, size = 0x20000, scoped, tag = 'input window, operand 0']
    #allocation3 [shape = 's32[2]{0}', space=sflag, size = 0x8, scoped, tag = 'scoped memory for tpu_custom_call.1']
    #allocation4 [shape = 's32[2]{0}', space=sflag, size = 0x8, scoped, tag = 'scoped memory for tpu_custom_call.1']
    #allocation5 [shape = 'u8[131072]{0}', space=vmem, size = 0x20000, scoped, tag = 'input window, operand 1, single buffered']
    #allocation6 [shape = 's32[1]{0}', space=sflag, size = 0x4, scoped, tag = 'scoped memory for tpu_custom_call.1']
    #allocation7 [shape = 'u8[131072]{0}', space=vmem, size = 0x20000, scoped, tag = 'input window, operand 3, single buffered']
    #allocation8 [shape = 'u8[131072]{0}', space=vmem, size = 0x20000, scoped, tag = 'output window, operand 0']
    #allocation9 [shape = 'u8[131072]{0}', space=vmem, size = 0x20000, scoped, tag = 'output window, operand 1']
    #allocation10 [shape = 's32[2]{0}', space=sflag, size = 0x8, scoped, tag = 'scoped memory for tpu_custom_call.1']
    %12 = vsyncpa [#allocation3], 0
    %s13 = scalar_lea.sflag [#allocation3], 1
    %14 = vsyncpa %s13, 0
    %15 = vsyncpa [#allocation6], 0
    %16 = vsyncpa [#allocation4], 0
    %s17 = scalar_lea.sflag [#allocation4], 1
    %18 = vsyncpa %s17, 0
    %19 = vsyncpa [#allocation10], 0
    %s20 = scalar_lea.sflag [#allocation10], 1
    %21 = vsyncpa %s20, 0
    loop: start=0, step=1, limit=4
    $region2: #{tpu_custom_call.1} parent=1 // loop_pre_header
      _
    $region3: #{tpu_custom_call.1} parent=1 // loop_header
      %s23 = sphi 0, %s27
      %p24 = scmp.ge.s32.totalorder %s23, 4
      %s33 = sphi 0, %s35
      %s36 = sphi 0, %s33
      %s37 = sphi 0, %s36
      %s53 = sphi 0, %s37
      %s57 = sphi 0, %s57
      %s59 = sphi 0, %s57
      %s60 = sphi 0, %s59
      %s74 = sphi 0, %s60
      %s78 = sphi 0, %s78
      %s80 = sphi 0, %s78
      %s81 = sphi 0, %s80
      %s95 = sphi 0, %s81
      %s99 = sphi 0, %s99
      %s101 = sphi 0, %s99
      %s102 = sphi 0, %s101
      %s116 = sphi 0, %s102
      %s120 = sphi 0, %s120
      %s122 = sphi 0, %s120
      %s123 = sphi 0, %s122
      %s137 = sphi 0, %s123
      %s143 = sphi 0, %s145
      %s146 = sphi 0, %s143
      %s147 = sphi 0, %s146
      %s163 = sphi 0, %s147
      %s169 = sphi 0, %s171
      %s172 = sphi 0, %s169
      %s173 = sphi 0, %s172
      %s189 = sphi 0, %s173
    $region4: #{tpu_custom_call.1} parent=1 // loop_header_branch
      %26 = sbr.rel (%p24) target = $region8
    $region5: #{tpu_custom_call.1} parent=1 // loop_body
      %s28 = ssub.s32 %s23, 1
      %s29 = ssub.s32 %s23, 2
      %s30 = sadd.s32 %s23, 1
      %s31 = ssub.s32 %s23, %s30
      %p32 = scmp.eq.s32.totalorder %s31, 0
      %s34 = sadd.s32 %s33, 1
      %s35 = scalar_select %p32, %s33, %s34
      %p38 = pneg %p32
      %p39 = scmp.eq.s32.totalorder %s23, 1
      %p40 = por %p38, %p39
      %p41 = scmp.ne.s32.totalorder %s33, %s36
      %p42 = scmp.eq.s32.totalorder %s23, 0
      %p43 = por %p41, %p42
      %p44 = scmp.ne.s32.totalorder %s33, %s36
      %p45 = scmp.eq.s32.totalorder %s28, 1
      %p46 = por %p44, %p45
      %p47 = scmp.ne.s32.totalorder %s36, %s37
      %p48 = scmp.eq.s32.totalorder %s28, 0
      %p49 = por %p47, %p48
      %p50 = scmp.ne.s32.totalorder %s36, %s37
      %p51 = scmp.eq.s32.totalorder %s29, 1
      %p52 = por %p50, %p51
      %p54 = scmp.ne.s32.totalorder %s37, %s53
      %p55 = scmp.eq.s32.totalorder %s29, 0
      %p56 = por %p54, %p55
      %s58 = sadd.s32 %s57, 1
      %p61 = scmp.eq.s32.totalorder %s23, 1
      %p62 = scmp.ne.s32.totalorder %s57, %s59
      %p63 = scmp.eq.s32.totalorder %s23, 0
      %p64 = por %p62, %p63
      %p65 = scmp.ne.s32.totalorder %s57, %s59
      %p66 = scmp.eq.s32.totalorder %s28, 1
      %p67 = por %p65, %p66
      %p68 = scmp.ne.s32.totalorder %s59, %s60
      %p69 = scmp.eq.s32.totalorder %s28, 0
      %p70 = por %p68, %p69
      %p71 = scmp.ne.s32.totalorder %s59, %s60
      %p72 = scmp.eq.s32.totalorder %s29, 1
      %p73 = por %p71, %p72
      %p75 = scmp.ne.s32.totalorder %s60, %s74
      %p76 = scmp.eq.s32.totalorder %s29, 0
      %p77 = por %p75, %p76
      %s79 = sadd.s32 %s78, 1
      %p82 = scmp.eq.s32.totalorder %s23, 1
      %p83 = scmp.ne.s32.totalorder %s78, %s80
      %p84 = scmp.eq.s32.totalorder %s23, 0
      %p85 = por %p83, %p84
      %p86 = scmp.ne.s32.totalorder %s78, %s80
      %p87 = scmp.eq.s32.totalorder %s28, 1
      %p88 = por %p86, %p87
      %p89 = scmp.ne.s32.totalorder %s80, %s81
      %p90 = scmp.eq.s32.totalorder %s28, 0
      %p91 = por %p89, %p90
      %p92 = scmp.ne.s32.totalorder %s80, %s81
      %p93 = scmp.eq.s32.totalorder %s29, 1
      %p94 = por %p92, %p93
      %p96 = scmp.ne.s32.totalorder %s81, %s95
      %p97 = scmp.eq.s32.totalorder %s29, 0
      %p98 = por %p96, %p97
      %s100 = sadd.s32 %s99, 1
      %p103 = scmp.eq.s32.totalorder %s23, 1
      %p104 = scmp.ne.s32.totalorder %s99, %s101
      %p105 = scmp.eq.s32.totalorder %s23, 0
      %p106 = por %p104, %p105
      %p107 = scmp.ne.s32.totalorder %s99, %s101
      %p108 = scmp.eq.s32.totalorder %s28, 1
      %p109 = por %p107, %p108
      %p110 = scmp.ne.s32.totalorder %s101, %s102
      %p111 = scmp.eq.s32.totalorder %s28, 0
      %p112 = por %p110, %p111
      %p113 = scmp.ne.s32.totalorder %s101, %s102
      %p114 = scmp.eq.s32.totalorder %s29, 1
      %p115 = por %p113, %p114
      %p117 = scmp.ne.s32.totalorder %s102, %s116
      %p118 = scmp.eq.s32.totalorder %s29, 0
      %p119 = por %p117, %p118
      %s121 = sadd.s32 %s120, 1
      %p124 = scmp.eq.s32.totalorder %s23, 1
      %p125 = scmp.ne.s32.totalorder %s120, %s122
      %p126 = scmp.eq.s32.totalorder %s23, 0
      %p127 = por %p125, %p126
      %p128 = scmp.ne.s32.totalorder %s120, %s122
      %p129 = scmp.eq.s32.totalorder %s28, 1
      %p130 = por %p128, %p129
      %p131 = scmp.ne.s32.totalorder %s122, %s123
      %p132 = scmp.eq.s32.totalorder %s28, 0
      %p133 = por %p131, %p132
      %p134 = scmp.ne.s32.totalorder %s122, %s123
      %p135 = scmp.eq.s32.totalorder %s29, 1
      %p136 = por %p134, %p135
      %p138 = scmp.ne.s32.totalorder %s123, %s137
      %p139 = scmp.eq.s32.totalorder %s29, 0
      %p140 = por %p138, %p139
      %s141 = ssub.s32 %s23, %s30
      %p142 = scmp.eq.s32.totalorder %s141, 0
      %s144 = sadd.s32 %s143, 1
      %s145 = scalar_select %p142, %s143, %s144
      %p148 = pneg %p142
      %p149 = scmp.eq.s32.totalorder %s23, 1
      %p150 = por %p148, %p149
      %p151 = scmp.ne.s32.totalorder %s143, %s146
      %p152 = scmp.eq.s32.totalorder %s23, 0
      %p153 = por %p151, %p152
      %p154 = scmp.ne.s32.totalorder %s143, %s146
      %p155 = scmp.eq.s32.totalorder %s28, 1
      %p156 = por %p154, %p155
      %p157 = scmp.ne.s32.totalorder %s146, %s147
      %p158 = scmp.eq.s32.totalorder %s28, 0
      %p159 = por %p157, %p158
      %p160 = scmp.ne.s32.totalorder %s146, %s147
      %p161 = scmp.eq.s32.totalorder %s29, 1
      %p162 = por %p160, %p161
      %p164 = scmp.ne.s32.totalorder %s147, %s163
      %p165 = scmp.eq.s32.totalorder %s29, 0
      %p166 = por %p164, %p165
      %s167 = ssub.s32 %s23, %s30
      %p168 = scmp.eq.s32.totalorder %s167, 0
      %s170 = sadd.s32 %s169, 1
      %s171 = scalar_select %p168, %s169, %s170
      %p174 = pneg %p168
      %p175 = scmp.eq.s32.totalorder %s23, 1
      %p176 = por %p174, %p175
      %p177 = scmp.ne.s32.totalorder %s169, %s172
      %p178 = scmp.eq.s32.totalorder %s23, 0
      %p179 = por %p177, %p178
      %p180 = scmp.ne.s32.totalorder %s169, %s172
      %p181 = scmp.eq.s32.totalorder %s28, 1
      %p182 = por %p180, %p181
      %p183 = scmp.ne.s32.totalorder %s172, %s173
      %p184 = scmp.eq.s32.totalorder %s28, 0
      %p185 = por %p183, %p184
      %p186 = scmp.ne.s32.totalorder %s172, %s173
      %p187 = scmp.eq.s32.totalorder %s29, 1
      %p188 = por %p186, %p187
      %p190 = scmp.ne.s32.totalorder %s173, %s189
      %p191 = scmp.eq.s32.totalorder %s29, 0
      %p192 = por %p190, %p191
      %p193 = scmp.le.s32.totalorder 1, %s23
      %p194 = scmp.lt.s32.totalorder %s23, 3
      %p195 = pnand %p193, %p194
      %p196 = pneg %p195
      // Predicated region
      $region9: #{tpu_custom_call.1} parent=5 // pred_check
        _
      $region10: #{tpu_custom_call.1} parent=5 // pred_check_branch
        %198 = sbr.rel (%p195) target = $region12
      $region11: #{tpu_custom_call.1} parent=5 // pred_region
        %s199 = ssub.s32 %s23, 1
        // Predicated region
        $region13: #{tpu_custom_call.1} parent=11 // pred_check
          %p200 = pneg %p70
        $region14: #{tpu_custom_call.1} parent=11 // pred_check_branch
          %202 = sbr.rel (%p200) target = $region16
        $region15: #{tpu_custom_call.1} parent=11 // pred_region
          %s204 = ssub.s32 4096, 4096
          %205 = vsyncadd [#allocation6], %s204
          %s206 = sshll.u32 [#allocation5], 4
          %s207 = int_to_ptr.vmem [resolvable:$true] %s206
          %212 = dma.hbm_to_vmem [thread:$0]  %s1, 4096, %s207, [#allocation6], 256, 256, 16
        $region16: #{tpu_custom_call.1} parent=11 // pred_fallthru
          _
        // Predicated region
        $region17: #{tpu_custom_call.1} parent=11 // pred_check
          %p213 = pneg %p91
        $region18: #{tpu_custom_call.1} parent=11 // pred_check_branch
          %215 = sbr.rel (%p213) target = $region20
        $region19: #{tpu_custom_call.1} parent=11 // pred_region
          _
        $region20: #{tpu_custom_call.1} parent=11 // pred_fallthru
          _
        // Predicated region
        $region21: #{tpu_custom_call.1} parent=11 // pred_check
          %p216 = pneg %p112
        $region22: #{tpu_custom_call.1} parent=11 // pred_check_branch
          %218 = sbr.rel (%p216) target = $region24
        $region23: #{tpu_custom_call.1} parent=11 // pred_region
          %s220 = ssub.s32 4096, 4096
          %221 = vsyncadd [#allocation6], %s220
          %s222 = sshll.u32 [#allocation7], 4
          %s223 = int_to_ptr.vmem [resolvable:$true] %s222
          %228 = dma.hbm_to_vmem [thread:$0]  %s3, 4096, %s223, [#allocation6], 128, 128, 8
        $region24: #{tpu_custom_call.1} parent=11 // pred_fallthru
          _
        // Predicated region
        $region25: #{tpu_custom_call.1} parent=11 // pred_check
          %p229 = pneg %p133
        $region26: #{tpu_custom_call.1} parent=11 // pred_check_branch
          %231 = sbr.rel (%p229) target = $region28
        $region27: #{tpu_custom_call.1} parent=11 // pred_region
          _
        $region28: #{tpu_custom_call.1} parent=11 // pred_fallthru
          _
      $region12: #{tpu_custom_call.1} parent=5 // pred_fallthru
        _
      %p232 = scmp.lt.s32.totalorder %s23, 2
      // Predicated region
      $region29: #{tpu_custom_call.1} parent=5 // pred_check
        %p233 = pneg %p232
      $region30: #{tpu_custom_call.1} parent=5 // pred_check_branch
        %235 = sbr.rel (%p233) target = $region32
      $region31: #{tpu_custom_call.1} parent=5 // pred_region
        // Predicated region
        $region33: #{tpu_custom_call.1} parent=31 // pred_check
          %p236 = pneg %p43
        $region34: #{tpu_custom_call.1} parent=31 // pred_check_branch
          %238 = sbr.rel (%p236) target = $region36
        $region35: #{tpu_custom_call.1} parent=31 // pred_region
          %s239 = sand.u32 %s33, 1
          %s240 = scalar_lea.sflag [#allocation3], %s239
          %s241 = sand.u32 %s33, 1
          %s242 = smul.addr %s241, 128
          %s243 = scalar_lea.vmem [#allocation2], %s242
          %s244 = smul.u32 16, %s23
          %s246 = ssub.s32 2048, 2048
          %247 = vsyncadd %s240, %s246
          %s248 = smul.addr %s244, 128
          %s249 = scalar_lea.hbm %s0, %s248
          %s250 = sshll.u32 %s243, 4
          %s251 = int_to_ptr.vmem [resolvable:$true] %s250
          %256 = dma.hbm_to_vmem [thread:$0]  %s249, 2048, %s251, %s240, 128, 128, 8
        $region36: #{tpu_custom_call.1} parent=31 // pred_fallthru
          _
      $region32: #{tpu_custom_call.1} parent=5 // pred_fallthru
        _
      %p257 = scmp.le.s32.totalorder 1, %s23
      %p258 = scmp.lt.s32.totalorder %s23, 3
      %p259 = pnand %p257, %p258
      %p260 = pneg %p259
      // Predicated region
      $region37: #{tpu_custom_call.1} parent=5 // pred_check
        _
      $region38: #{tpu_custom_call.1} parent=5 // pred_check_branch
        %262 = sbr.rel (%p259) target = $region40
      $region39: #{tpu_custom_call.1} parent=5 // pred_region
        %s263 = ssub.s32 %s23, 1
        %s264 = sand.u32 %s36, 1
        %s265 = scalar_lea.sflag [#allocation3], %s264
        %s266 = sand.u32 %s36, 1
        %s267 = smul.addr %s266, 128
        %s268 = scalar_lea.vmem [#allocation2], %s267
        // Predicated region
        $region41: #{tpu_custom_call.1} parent=39 // pred_check
          %p269 = pneg %p49
        $region42: #{tpu_custom_call.1} parent=39 // pred_check_branch
          %271 = sbr.rel (%p269) target = $region44
        $region43: #{tpu_custom_call.1} parent=39 // pred_region
          %272 = dma.done %s265, 2048
        $region44: #{tpu_custom_call.1} parent=39 // pred_fallthru
          _
        // Predicated region
        $region45: #{tpu_custom_call.1} parent=39 // pred_check
          %p273 = pneg %p70
        $region46: #{tpu_custom_call.1} parent=39 // pred_check_branch
          %275 = sbr.rel (%p273) target = $region48
        $region47: #{tpu_custom_call.1} parent=39 // pred_region
          %276 = dma.done [#allocation6], 4096
        $region48: #{tpu_custom_call.1} parent=39 // pred_fallthru
          _
        // Predicated region
        $region49: #{tpu_custom_call.1} parent=39 // pred_check
          %p277 = pneg %p112
        $region50: #{tpu_custom_call.1} parent=39 // pred_check_branch
          %279 = sbr.rel (%p277) target = $region52
        $region51: #{tpu_custom_call.1} parent=39 // pred_region
          %280 = dma.done [#allocation6], 4096
        $region52: #{tpu_custom_call.1} parent=39 // pred_fallthru
          _
        %s281 = sand.u32 %s36, 1
        %s282 = scalar_lea.sflag [#allocation3], %s281
        %s283 = sand.u32 %s36, 1
        %s284 = smul.addr %s283, 128
        %s285 = scalar_lea.vmem [#allocation2], %s284
        %p286 = pneg %p49
        %p287 = pneg %p46
        %p288 = pneg %p70
        %p289 = pneg %p67
        %p290 = pneg %p91
        %p291 = pneg %p88
        %p292 = pneg %p112
        %p293 = pneg %p109
        %p294 = pneg %p133
        %p295 = pneg %p130
        %p296 = pneg %p159
        %p297 = pneg %p156
        %s298 = sand.u32 %s146, 1
        %s299 = scalar_lea.sflag [#allocation4], %s298
        %s300 = sand.u32 %s146, 1
        %s301 = smul.addr %s300, 128
        %s302 = scalar_lea.vmem [#allocation8], %s301
        %p303 = pneg %p185
        %p304 = pneg %p182
        %s305 = sand.u32 %s172, 1
        %s306 = scalar_lea.sflag [#allocation10], %s305
        %s307 = sand.u32 %s172, 1
        %s308 = smul.addr %s307, 128
        %s309 = scalar_lea.vmem [#allocation9], %s308
        %s310 = smul.u32 16, %s28
        %s311 = smul.u32 16, %s28
        %s312 = smul.u32 16, %s28
        %v313 = vld [vmem:[%s268] sm:$0xff]
        %v314 = vld [vmem:[%s268 + $0x8] sm:$0xff]
        %v315 = vld [vmem:[%s268 + $0x10] sm:$0xff]
        %v316 = vld [vmem:[%s268 + $0x18] sm:$0xff]
        %v317 = vld [vmem:[%s268 + $0x20] sm:$0xff]
        %v318 = vld [vmem:[%s268 + $0x28] sm:$0xff]
        %v319 = vld [vmem:[%s268 + $0x30] sm:$0xff]
        %v320 = vld [vmem:[%s268 + $0x38] sm:$0xff]
        %v321 = vld [vmem:[%s268 + $0x40] sm:$0xff]
        %v322 = vld [vmem:[%s268 + $0x48] sm:$0xff]
        %v323 = vld [vmem:[%s268 + $0x50] sm:$0xff]
        %v324 = vld [vmem:[%s268 + $0x58] sm:$0xff]
        %v325 = vld [vmem:[%s268 + $0x60] sm:$0xff]
        %v326 = vld [vmem:[%s268 + $0x68] sm:$0xff]
        %v327 = vld [vmem:[%s268 + $0x70] sm:$0xff]
        %v328 = vld [vmem:[%s268 + $0x78] sm:$0xff]
        %v329 = vld [vmem:[#allocation5] sm:$0xff]
        %v330 = vld [vmem:[#allocation5 + $0x8] sm:$0xff]
        %v331 = vld [vmem:[#allocation5 + $0x10] sm:$0xff]
        %v332 = vld [vmem:[#allocation5 + $0x18] sm:$0xff]
        %v333 = vld [vmem:[#allocation5 + $0x20] sm:$0xff]
        %v334 = vld [vmem:[#allocation5 + $0x28] sm:$0xff]
        %v335 = vld [vmem:[#allocation5 + $0x30] sm:$0xff]
        %v336 = vld [vmem:[#allocation5 + $0x38] sm:$0xff]
        %v337 = vld [vmem:[#allocation5 + $0x40] sm:$0xff]
        %v338 = vld [vmem:[#allocation5 + $0x48] sm:$0xff]
        %v339 = vld [vmem:[#allocation5 + $0x50] sm:$0xff]
        %v340 = vld [vmem:[#allocation5 + $0x58] sm:$0xff]
        %v341 = vld [vmem:[#allocation5 + $0x60] sm:$0xff]
        %v342 = vld [vmem:[#allocation5 + $0x68] sm:$0xff]
        %v343 = vld [vmem:[#allocation5 + $0x70] sm:$0xff]
        %v344 = vld [vmem:[#allocation5 + $0x78] sm:$0xff]
        %v345 = vld [vmem:[#allocation5 + $0x80] sm:$0xff]
        %v346 = vld [vmem:[#allocation5 + $0x88] sm:$0xff]
        %v347 = vld [vmem:[#allocation5 + $0x90] sm:$0xff]
        %v348 = vld [vmem:[#allocation5 + $0x98] sm:$0xff]
        %v349 = vld [vmem:[#allocation5 + $0xa0] sm:$0xff]
        %v350 = vld [vmem:[#allocation5 + $0xa8] sm:$0xff]
        %v351 = vld [vmem:[#allocation5 + $0xb0] sm:$0xff]
        %v352 = vld [vmem:[#allocation5 + $0xb8] sm:$0xff]
        %v353 = vld [vmem:[#allocation5 + $0xc0] sm:$0xff]
        %v354 = vld [vmem:[#allocation5 + $0xc8] sm:$0xff]
        %v355 = vld [vmem:[#allocation5 + $0xd0] sm:$0xff]
        %v356 = vld [vmem:[#allocation5 + $0xd8] sm:$0xff]
        %v357 = vld [vmem:[#allocation5 + $0xe0] sm:$0xff]
        %v358 = vld [vmem:[#allocation5 + $0xe8] sm:$0xff]
        %v359 = vld [vmem:[#allocation5 + $0xf0] sm:$0xff]
        %v360 = vld [vmem:[#allocation5 + $0xf8] sm:$0xff]
        %v361 = vld [vmem:[%s2] sm:$0x3]
        %v363 = vlaneseq
        %v364 = vshrl.u32 %v363, 7
        %v365 = vsub.s32 0, %v364
        %v366 = vrot.slane %v361, %v365
        %v367 = vlaneseq
        %v368 = vshrl.u32 %v367, 7
        %v369 = vsub.s32 1, %v368
        %v370 = vrot.slane %v361, %v369
        %373 = vmatprep.subr.mxu0 %v360
        %374 = vmatpush1.msra.mxu0 %v359
        %375 = vmatprep.subr.mxu0 %v358
        %376 = vmatpush1.msra.mxu0 %v357
        %377 = vmatprep.subr.mxu0 %v356
        %378 = vmatpush1.msra.mxu0 %v355
        %379 = vmatprep.subr.mxu0 %v354
        %380 = vmatpush1.msra.mxu0 %v353
        %381 = vmatprep.subr.mxu0 %v352
        %382 = vmatpush1.msra.mxu0 %v351
        %383 = vmatprep.subr.mxu0 %v350
        %384 = vmatpush1.msra.mxu0 %v349
        %385 = vmatprep.subr.mxu0 %v348
        %386 = vmatpush1.msra.mxu0 %v347
        %387 = vmatprep.subr.mxu0 %v346
        %388 = vmatpush1.msra.mxu0 %v345
        %389 = vmatprep.subr.mxu0 %v344
        %390 = vmatpush1.msra.mxu0 %v343
        %391 = vmatprep.subr.mxu0 %v342
        %392 = vmatpush1.msra.mxu0 %v341
        %393 = vmatprep.subr.mxu0 %v340
        %394 = vmatpush1.msra.mxu0 %v339
        %395 = vmatprep.subr.mxu0 %v338
        %396 = vmatpush1.msra.mxu0 %v337
        %397 = vmatprep.subr.mxu0 %v336
        %398 = vmatpush1.msra.mxu0 %v335
        %399 = vmatprep.subr.mxu0 %v334
        %400 = vmatpush1.msra.mxu0 %v333
        %401 = vmatprep.subr.mxu0 %v332
        %402 = vmatpush1.msra.mxu0 %v331
        %403 = vmatprep.subr.mxu0 %v330
        %404 = vmatpush1.msra.mxu0 %v329
        %405 = vmatprep.subr.mxu0 0.0
        %406 = vmatpush2.msra.mxu0 0.0
        %407 = vmatprep.subr.mxu0 0.0
        %408 = vmatpush2.msra.mxu0 0.0
        %409 = vmatprep.subr.mxu0 0.0
        %410 = vmatpush2.msra.mxu0 0.0
        %411 = vmatprep.subr.mxu0 0.0
        %412 = vmatpush2.msra.mxu0 0.0
        %413 = vmatprep.subr.mxu0 0.0
        %414 = vmatpush2.msra.mxu0 0.0
        %415 = vmatprep.subr.mxu0 0.0
        %416 = vmatpush2.msra.mxu0 0.0
        %417 = vmatprep.subr.mxu0 0.0
        %418 = vmatpush2.msra.mxu0 0.0
        %419 = vmatprep.subr.mxu0 0.0
        %420 = vmatpush2.msra.mxu0 0.0
        %421 = vmatprep.subr.mxu0 0.0
        %422 = vmatpush2.msra.mxu0 0.0
        %423 = vmatprep.subr.mxu0 0.0
        %424 = vmatpush2.msra.mxu0 0.0
        %425 = vmatprep.subr.mxu0 0.0
        %426 = vmatpush2.msra.mxu0 0.0
        %427 = vmatprep.subr.mxu0 0.0
        %428 = vmatpush2.msra.mxu0 0.0
        %429 = vmatprep.subr.mxu0 0.0
        %430 = vmatpush2.msra.mxu0 0.0
        %431 = vmatprep.subr.mxu0 0.0
        %432 = vmatpush2.msra.mxu0 0.0
        %433 = vmatprep.subr.mxu0 0.0
        %434 = vmatpush2.msra.mxu0 0.0
        %435 = vmatprep.subr.mxu0 0.0
        %436 = vmatpush2.msra.mxu0 0.0
        %437 = vmatprep.mubr.f32.mxu0 0.0
        %438 = vmatmul.mubr.f32.gmra.mxu0 %v313
        %v439 = vpop.f32.mrf.mxu0
        %v440 = vadd.f32 %v366, %v439
        %v441 = vpop.f32.mrf.mxu0
        %v442 = vadd.f32 %v370, %v441
        %443 = vmatprep.mubr.f32.mxu0 0.0
        %444 = vmatmul.mubr.f32.gmra.mxu0 %v314
        %v445 = vpop.f32.mrf.mxu0
        %v446 = vadd.f32 %v366, %v445
        %v447 = vpop.f32.mrf.mxu0
        %v448 = vadd.f32 %v370, %v447
        %449 = vmatprep.mubr.f32.mxu0 0.0
        %450 = vmatmul.mubr.f32.gmra.mxu0 %v315
        %v451 = vpop.f32.mrf.mxu0
        %v452 = vadd.f32 %v366, %v451
        %v453 = vpop.f32.mrf.mxu0
        %v454 = vadd.f32 %v370, %v453
        %455 = vmatprep.mubr.f32.mxu0 0.0
        %456 = vmatmul.mubr.f32.gmra.mxu0 %v316
        %v457 = vpop.f32.mrf.mxu0
        %v458 = vadd.f32 %v366, %v457
        %v459 = vpop.f32.mrf.mxu0
        %v460 = vadd.f32 %v370, %v459
        %461 = vmatprep.mubr.f32.mxu0 0.0
        %462 = vmatmul.mubr.f32.gmra.mxu0 %v317
        %v463 = vpop.f32.mrf.mxu0
        %v464 = vadd.f32 %v366, %v463
        %v465 = vpop.f32.mrf.mxu0
        %v466 = vadd.f32 %v370, %v465
        %467 = vmatprep.mubr.f32.mxu0 0.0
        %468 = vmatmul.mubr.f32.gmra.mxu0 %v318
        %v469 = vpop.f32.mrf.mxu0
        %v470 = vadd.f32 %v366, %v469
        %v471 = vpop.f32.mrf.mxu0
        %v472 = vadd.f32 %v370, %v471
        %473 = vmatprep.mubr.f32.mxu0 0.0
        %474 = vmatmul.mubr.f32.gmra.mxu0 %v319
        %v475 = vpop.f32.mrf.mxu0
        %v476 = vadd.f32 %v366, %v475
        %v477 = vpop.f32.mrf.mxu0
        %v478 = vadd.f32 %v370, %v477
        %479 = vmatprep.mubr.f32.mxu0 0.0
        %480 = vmatmul.mubr.f32.gmra.mxu0 %v320
        %v481 = vpop.f32.mrf.mxu0
        %v482 = vadd.f32 %v366, %v481
        %v483 = vpop.f32.mrf.mxu0
        %v484 = vadd.f32 %v370, %v483
        %485 = vmatprep.mubr.f32.mxu0 0.0
        %486 = vmatmul.mubr.f32.gmra.mxu0 %v321
        %v487 = vpop.f32.mrf.mxu0
        %v488 = vadd.f32 %v366, %v487
        %v489 = vpop.f32.mrf.mxu0
        %v490 = vadd.f32 %v370, %v489
        %491 = vmatprep.mubr.f32.mxu0 0.0
        %492 = vmatmul.mubr.f32.gmra.mxu0 %v322
        %v493 = vpop.f32.mrf.mxu0
        %v494 = vadd.f32 %v366, %v493
        %v495 = vpop.f32.mrf.mxu0
        %v496 = vadd.f32 %v370, %v495
        %497 = vmatprep.mubr.f32.mxu0 0.0
        %498 = vmatmul.mubr.f32.gmra.mxu0 %v323
        %v499 = vpop.f32.mrf.mxu0
        %v500 = vadd.f32 %v366, %v499
        %v501 = vpop.f32.mrf.mxu0
        %v502 = vadd.f32 %v370, %v501
        %503 = vmatprep.mubr.f32.mxu0 0.0
        %504 = vmatmul.mubr.f32.gmra.mxu0 %v324
        %v505 = vpop.f32.mrf.mxu0
        %v506 = vadd.f32 %v366, %v505
        %v507 = vpop.f32.mrf.mxu0
        %v508 = vadd.f32 %v370, %v507
        %509 = vmatprep.mubr.f32.mxu0 0.0
        %510 = vmatmul.mubr.f32.gmra.mxu0 %v325
        %v511 = vpop.f32.mrf.mxu0
        %v512 = vadd.f32 %v366, %v511
        %v513 = vpop.f32.mrf.mxu0
        %v514 = vadd.f32 %v370, %v513
        %515 = vmatprep.mubr.f32.mxu0 0.0
        %516 = vmatmul.mubr.f32.gmra.mxu0 %v326
        %v517 = vpop.f32.mrf.mxu0
        %v518 = vadd.f32 %v366, %v517
        %v519 = vpop.f32.mrf.mxu0
        %v520 = vadd.f32 %v370, %v519
        %521 = vmatprep.mubr.f32.mxu0 0.0
        %522 = vmatmul.mubr.f32.gmra.mxu0 %v327
        %v523 = vpop.f32.mrf.mxu0
        %v524 = vadd.f32 %v366, %v523
        %v525 = vpop.f32.mrf.mxu0
        %v526 = vadd.f32 %v370, %v525
        %527 = vmatprep.mubr.f32.mxu0 0.0
        %528 = vmatmul.mubr.f32.gmra.mxu0 %v328
        %v529 = vpop.f32.mrf.mxu0
        %v530 = vadd.f32 %v366, %v529
        %v531 = vpop.f32.mrf.mxu0
        %v532 = vadd.f32 %v370, %v531
        %533 = vdwg.mxu0
        %v534 = vmax.f32 %v440, 0.0
        %v535 = vmax.f32 %v442, 0.0
        %v536 = vmax.f32 %v446, 0.0
        %v537 = vmax.f32 %v448, 0.0
        %v538 = vmax.f32 %v452, 0.0
        %v539 = vmax.f32 %v454, 0.0
        %v540 = vmax.f32 %v458, 0.0
        %v541 = vmax.f32 %v460, 0.0
        %v542 = vmax.f32 %v464, 0.0
        %v543 = vmax.f32 %v466, 0.0
        %v544 = vmax.f32 %v470, 0.0
        %v545 = vmax.f32 %v472, 0.0
        %v546 = vmax.f32 %v476, 0.0
        %v547 = vmax.f32 %v478, 0.0
        %v548 = vmax.f32 %v482, 0.0
        %v549 = vmax.f32 %v484, 0.0
        %v550 = vmax.f32 %v488, 0.0
        %v551 = vmax.f32 %v490, 0.0
        %v552 = vmax.f32 %v494, 0.0
        %v553 = vmax.f32 %v496, 0.0
        %v554 = vmax.f32 %v500, 0.0
        %v555 = vmax.f32 %v502, 0.0
        %v556 = vmax.f32 %v506, 0.0
        %v557 = vmax.f32 %v508, 0.0
        %v558 = vmax.f32 %v512, 0.0
        %v559 = vmax.f32 %v514, 0.0
        %v560 = vmax.f32 %v518, 0.0
        %v561 = vmax.f32 %v520, 0.0
        %v562 = vmax.f32 %v524, 0.0
        %v563 = vmax.f32 %v526, 0.0
        %v564 = vmax.f32 %v530, 0.0
        %v565 = vmax.f32 %v532, 0.0
        %v566 = vld [vmem:[#allocation7] sm:$0xff]
        %v567 = vld [vmem:[#allocation7 + $0x8] sm:$0xff]
        %v568 = vld [vmem:[#allocation7 + $0x10] sm:$0xff]
        %v569 = vld [vmem:[#allocation7 + $0x18] sm:$0xff]
        %v570 = vld [vmem:[#allocation7 + $0x20] sm:$0xff]
        %v571 = vld [vmem:[#allocation7 + $0x28] sm:$0xff]
        %v572 = vld [vmem:[#allocation7 + $0x30] sm:$0xff]
        %v573 = vld [vmem:[#allocation7 + $0x38] sm:$0xff]
        %v574 = vld [vmem:[#allocation7 + $0x40] sm:$0xff]
        %v575 = vld [vmem:[#allocation7 + $0x48] sm:$0xff]
        %v576 = vld [vmem:[#allocation7 + $0x50] sm:$0xff]
        %v577 = vld [vmem:[#allocation7 + $0x58] sm:$0xff]
        %v578 = vld [vmem:[#allocation7 + $0x60] sm:$0xff]
        %v579 = vld [vmem:[#allocation7 + $0x68] sm:$0xff]
        %v580 = vld [vmem:[#allocation7 + $0x70] sm:$0xff]
        %v581 = vld [vmem:[#allocation7 + $0x78] sm:$0xff]
        %v582 = vld [vmem:[#allocation7 + $0x80] sm:$0xff]
        %v583 = vld [vmem:[#allocation7 + $0x88] sm:$0xff]
        %v584 = vld [vmem:[#allocation7 + $0x90] sm:$0xff]
        %v585 = vld [vmem:[#allocation7 + $0x98] sm:$0xff]
        %v586 = vld [vmem:[#allocation7 + $0xa0] sm:$0xff]
        %v587 = vld [vmem:[#allocation7 + $0xa8] sm:$0xff]
        %v588 = vld [vmem:[#allocation7 + $0xb0] sm:$0xff]
        %v589 = vld [vmem:[#allocation7 + $0xb8] sm:$0xff]
        %v590 = vld [vmem:[#allocation7 + $0xc0] sm:$0xff]
        %v591 = vld [vmem:[#allocation7 + $0xc8] sm:$0xff]
        %v592 = vld [vmem:[#allocation7 + $0xd0] sm:$0xff]
        %v593 = vld [vmem:[#allocation7 + $0xd8] sm:$0xff]
        %v594 = vld [vmem:[#allocation7 + $0xe0] sm:$0xff]
        %v595 = vld [vmem:[#allocation7 + $0xe8] sm:$0xff]
        %v596 = vld [vmem:[#allocation7 + $0xf0] sm:$0xff]
        %v597 = vld [vmem:[#allocation7 + $0xf8] sm:$0xff]
        %v598 = vld [vmem:[%s4] sm:$0x1]
        %v600 = vlaneseq
        %v601 = vshrl.u32 %v600, 7
        %v602 = vsub.s32 0, %v601
        %v603 = vrot.slane %v598, %v602
        %605 = vmatprep.subr.mxu0 0.0
        %606 = vmatpush1.msra.mxu0 %v581
        %607 = vmatprep.subr.mxu0 0.0
        %608 = vmatpush1.msra.mxu0 %v580
        %609 = vmatprep.subr.mxu0 0.0
        %610 = vmatpush1.msra.mxu0 %v579
        %611 = vmatprep.subr.mxu0 0.0
        %612 = vmatpush1.msra.mxu0 %v578
        %613 = vmatprep.subr.mxu0 0.0
        %614 = vmatpush1.msra.mxu0 %v577
        %615 = vmatprep.subr.mxu0 0.0
        %616 = vmatpush1.msra.mxu0 %v576
        %617 = vmatprep.subr.mxu0 0.0
        %618 = vmatpush1.msra.mxu0 %v575
        %619 = vmatprep.subr.mxu0 0.0
        %620 = vmatpush1.msra.mxu0 %v574
        %621 = vmatprep.subr.mxu0 0.0
        %622 = vmatpush1.msra.mxu0 %v573
        %623 = vmatprep.subr.mxu0 0.0
        %624 = vmatpush1.msra.mxu0 %v572
        %625 = vmatprep.subr.mxu0 0.0
        %626 = vmatpush1.msra.mxu0 %v571
        %627 = vmatprep.subr.mxu0 0.0
        %628 = vmatpush1.msra.mxu0 %v570
        %629 = vmatprep.subr.mxu0 0.0
        %630 = vmatpush1.msra.mxu0 %v569
        %631 = vmatprep.subr.mxu0 0.0
        %632 = vmatpush1.msra.mxu0 %v568
        %633 = vmatprep.subr.mxu0 0.0
        %634 = vmatpush1.msra.mxu0 %v567
        %635 = vmatprep.subr.mxu0 0.0
        %636 = vmatpush1.msra.mxu0 %v566
        %637 = vmatprep.subr.mxu0 0.0
        %638 = vmatpush2.msra.mxu0 %v597
        %639 = vmatprep.subr.mxu0 0.0
        %640 = vmatpush2.msra.mxu0 %v596
        %641 = vmatprep.subr.mxu0 0.0
        %642 = vmatpush2.msra.mxu0 %v595
        %643 = vmatprep.subr.mxu0 0.0
        %644 = vmatpush2.msra.mxu0 %v594
        %645 = vmatprep.subr.mxu0 0.0
        %646 = vmatpush2.msra.mxu0 %v593
        %647 = vmatprep.subr.mxu0 0.0
        %648 = vmatpush2.msra.mxu0 %v592
        %649 = vmatprep.subr.mxu0 0.0
        %650 = vmatpush2.msra.mxu0 %v591
        %651 = vmatprep.subr.mxu0 0.0
        %652 = vmatpush2.msra.mxu0 %v590
        %653 = vmatprep.subr.mxu0 0.0
        %654 = vmatpush2.msra.mxu0 %v589
        %655 = vmatprep.subr.mxu0 0.0
        %656 = vmatpush2.msra.mxu0 %v588
        %657 = vmatprep.subr.mxu0 0.0
        %658 = vmatpush2.msra.mxu0 %v587
        %659 = vmatprep.subr.mxu0 0.0
        %660 = vmatpush2.msra.mxu0 %v586
        %661 = vmatprep.subr.mxu0 0.0
        %662 = vmatpush2.msra.mxu0 %v585
        %663 = vmatprep.subr.mxu0 0.0
        %664 = vmatpush2.msra.mxu0 %v584
        %665 = vmatprep.subr.mxu0 0.0
        %666 = vmatpush2.msra.mxu0 %v583
        %667 = vmatprep.subr.mxu0 0.0
        %668 = vmatpush2.msra.mxu0 %v582
        %669 = vmatprep.mubr.f32.mxu0 %v535
        %670 = vmatmul.mubr.f32.gmra.mxu0 %v534
        %v671 = vpop.f32.mrf.mxu0
        %v672 = vadd.f32 %v603, %v671
        %v673 = vpop.f32.mrf.mxu0
        %674 = vmatprep.mubr.f32.mxu0 %v537
        %675 = vmatmul.mubr.f32.gmra.mxu0 %v536
        %v676 = vpop.f32.mrf.mxu0
        %v677 = vadd.f32 %v603, %v676
        %v678 = vpop.f32.mrf.mxu0
        %679 = vmatprep.mubr.f32.mxu0 %v539
        %680 = vmatmul.mubr.f32.gmra.mxu0 %v538
        %v681 = vpop.f32.mrf.mxu0
        %v682 = vadd.f32 %v603, %v681
        %v683 = vpop.f32.mrf.mxu0
        %684 = vmatprep.mubr.f32.mxu0 %v541
        %685 = vmatmul.mubr.f32.gmra.mxu0 %v540
        %v686 = vpop.f32.mrf.mxu0
        %v687 = vadd.f32 %v603, %v686
        %v688 = vpop.f32.mrf.mxu0
        %689 = vmatprep.mubr.f32.mxu0 %v543
        %690 = vmatmul.mubr.f32.gmra.mxu0 %v542
        %v691 = vpop.f32.mrf.mxu0
        %v692 = vadd.f32 %v603, %v691
        %v693 = vpop.f32.mrf.mxu0
        %694 = vmatprep.mubr.f32.mxu0 %v545
        %695 = vmatmul.mubr.f32.gmra.mxu0 %v544
        %v696 = vpop.f32.mrf.mxu0
        %v697 = vadd.f32 %v603, %v696
        %v698 = vpop.f32.mrf.mxu0
        %699 = vmatprep.mubr.f32.mxu0 %v547
        %700 = vmatmul.mubr.f32.gmra.mxu0 %v546
        %v701 = vpop.f32.mrf.mxu0
        %v702 = vadd.f32 %v603, %v701
        %v703 = vpop.f32.mrf.mxu0
        %704 = vmatprep.mubr.f32.mxu0 %v549
        %705 = vmatmul.mubr.f32.gmra.mxu0 %v548
        %v706 = vpop.f32.mrf.mxu0
        %v707 = vadd.f32 %v603, %v706
        %v708 = vpop.f32.mrf.mxu0
        %709 = vmatprep.mubr.f32.mxu0 %v551
        %710 = vmatmul.mubr.f32.gmra.mxu0 %v550
        %v711 = vpop.f32.mrf.mxu0
        %v712 = vadd.f32 %v603, %v711
        %v713 = vpop.f32.mrf.mxu0
        %714 = vmatprep.mubr.f32.mxu0 %v553
        %715 = vmatmul.mubr.f32.gmra.mxu0 %v552
        %v716 = vpop.f32.mrf.mxu0
        %v717 = vadd.f32 %v603, %v716
        %v718 = vpop.f32.mrf.mxu0
        %719 = vmatprep.mubr.f32.mxu0 %v555
        %720 = vmatmul.mubr.f32.gmra.mxu0 %v554
        %v721 = vpop.f32.mrf.mxu0
        %v722 = vadd.f32 %v603, %v721
        %v723 = vpop.f32.mrf.mxu0
        %724 = vmatprep.mubr.f32.mxu0 %v557
        %725 = vmatmul.mubr.f32.gmra.mxu0 %v556
        %v726 = vpop.f32.mrf.mxu0
        %v727 = vadd.f32 %v603, %v726
        %v728 = vpop.f32.mrf.mxu0
        %729 = vmatprep.mubr.f32.mxu0 %v559
        %730 = vmatmul.mubr.f32.gmra.mxu0 %v558
        %v731 = vpop.f32.mrf.mxu0
        %v732 = vadd.f32 %v603, %v731
        %v733 = vpop.f32.mrf.mxu0
        %734 = vmatprep.mubr.f32.mxu0 %v561
        %735 = vmatmul.mubr.f32.gmra.mxu0 %v560
        %v736 = vpop.f32.mrf.mxu0
        %v737 = vadd.f32 %v603, %v736
        %v738 = vpop.f32.mrf.mxu0
        %739 = vmatprep.mubr.f32.mxu0 %v563
        %740 = vmatmul.mubr.f32.gmra.mxu0 %v562
        %v741 = vpop.f32.mrf.mxu0
        %v742 = vadd.f32 %v603, %v741
        %v743 = vpop.f32.mrf.mxu0
        %744 = vmatprep.mubr.f32.mxu0 %v565
        %745 = vmatmul.mubr.f32.gmra.mxu0 %v564
        %v746 = vpop.f32.mrf.mxu0
        %v747 = vadd.f32 %v603, %v746
        %v748 = vpop.f32.mrf.mxu0
        %749 = vdwg.mxu0
        %v750 = vlaneseq
        %v751 = vand.u32 %v750, 127
        %vm752 = vcmp.ge.s32.totalorder %v751, 2
        %vm753 = vcmp.lt.s32.totalorder %v751, 5
        %vm754 = vmand %vm752, %vm753
        %vm755 = vcmp.ne.f32.partialorder %v672, %v672
        %vm756 = vcmp.ne.f32.partialorder %v677, %v677
        %vm757 = vcmp.ne.f32.partialorder %v682, %v682
        %vm758 = vcmp.ne.f32.partialorder %v687, %v687
        %vm759 = vcmp.ne.f32.partialorder %v692, %v692
        %vm760 = vcmp.ne.f32.partialorder %v697, %v697
        %vm761 = vcmp.ne.f32.partialorder %v702, %v702
        %vm762 = vcmp.ne.f32.partialorder %v707, %v707
        %vm763 = vcmp.ne.f32.partialorder %v712, %v712
        %vm764 = vcmp.ne.f32.partialorder %v717, %v717
        %vm765 = vcmp.ne.f32.partialorder %v722, %v722
        %vm766 = vcmp.ne.f32.partialorder %v727, %v727
        %vm767 = vcmp.ne.f32.partialorder %v732, %v732
        %vm768 = vcmp.ne.f32.partialorder %v737, %v737
        %vm769 = vcmp.ne.f32.partialorder %v742, %v742
        %vm770 = vcmp.ne.f32.partialorder %v747, %v747
        %vm771 = vmand %vm755, %vm754
        %vm772 = vmand %vm756, %vm754
        %vm773 = vmand %vm757, %vm754
        %vm774 = vmand %vm758, %vm754
        %vm775 = vmand %vm759, %vm754
        %vm776 = vmand %vm760, %vm754
        %vm777 = vmand %vm761, %vm754
        %vm778 = vmand %vm762, %vm754
        %vm779 = vmand %vm763, %vm754
        %vm780 = vmand %vm764, %vm754
        %vm781 = vmand %vm765, %vm754
        %vm782 = vmand %vm766, %vm754
        %vm783 = vmand %vm767, %vm754
        %vm784 = vmand %vm768, %vm754
        %vm785 = vmand %vm769, %vm754
        %vm786 = vmand %vm770, %vm754
        %v787 = vsel %vm771, 1.0, 0.0
        %v788 = vsel %vm772, 1.0, 0.0
        %v789 = vsel %vm773, 1.0, 0.0
        %v790 = vsel %vm774, 1.0, 0.0
        %v791 = vsel %vm775, 1.0, 0.0
        %v792 = vsel %vm776, 1.0, 0.0
        %v793 = vsel %vm777, 1.0, 0.0
        %v794 = vsel %vm778, 1.0, 0.0
        %v795 = vsel %vm779, 1.0, 0.0
        %v796 = vsel %vm780, 1.0, 0.0
        %v797 = vsel %vm781, 1.0, 0.0
        %v798 = vsel %vm782, 1.0, 0.0
        %v799 = vsel %vm783, 1.0, 0.0
        %v800 = vsel %vm784, 1.0, 0.0
        %v801 = vsel %vm785, 1.0, 0.0
        %v802 = vsel %vm786, 1.0, 0.0
        %v803 = vmax.f32 %v787, %v791
        %v804 = vmax.f32 %v788, %v792
        %v805 = vmax.f32 %v789, %v793
        %v806 = vmax.f32 %v790, %v794
        %v807 = vmax.f32 %v803, %v795
        %v808 = vmax.f32 %v804, %v796
        %v809 = vmax.f32 %v805, %v797
        %v810 = vmax.f32 %v806, %v798
        %v811 = vmax.f32 %v807, %v799
        %v812 = vmax.f32 %v808, %v800
        %v813 = vmax.f32 %v809, %v801
        %v814 = vmax.f32 %v810, %v802
        %v815 = vmax.f32 %v811, %v812
        %v816 = vmax.f32 %v813, %v814
        %v817 = vmax.f32 %v815, %v816
        %818 = vmax.xlane.f32.xlu0 %v817
        %v819 = vpop.xlane.xlu0 %818
        %v820 = vrot.slane %v819, 4
        %v821 = vmax.f32 %v819, %v820
        %v822 = vrot.slane %v821, 2
        %v823 = vmax.f32 %v821, %v822
        %v824 = vrot.slane %v823, 1
        %v825 = vmax.f32 %v823, %v824
        %s826 = vtos %v825
        %p827 = scmp.gt.f32.partialorder %s826, 0.0
        %s828 = scalar_select %p827, 1, 0
        %v829 = vstv %s828
        %vm830 = vcmp.eq.s32.totalorder %v829, 1
        %vm831 = vmand %vm754, %vm830
        %v832 = vsel %vm831, 0.0, %v672
        %v833 = vsel %vm831, 0.0, %v677
        %v834 = vsel %vm831, 0.0, %v682
        %v835 = vsel %vm831, 0.0, %v687
        %v836 = vsel %vm831, 0.0, %v692
        %v837 = vsel %vm831, 0.0, %v697
        %v838 = vsel %vm831, 0.0, %v702
        %v839 = vsel %vm831, 0.0, %v707
        %v840 = vsel %vm831, 0.0, %v712
        %v841 = vsel %vm831, 0.0, %v717
        %v842 = vsel %vm831, 0.0, %v722
        %v843 = vsel %vm831, 0.0, %v727
        %v844 = vsel %vm831, 0.0, %v732
        %v845 = vsel %vm831, 0.0, %v737
        %v846 = vsel %vm831, 0.0, %v742
        %v847 = vsel %vm831, 0.0, %v747
        %848 = vst [vmem:[%s302] sm:$0xff] %v832
        %849 = vst [vmem:[%s302 + $0x8] sm:$0xff] %v833
        %850 = vst [vmem:[%s302 + $0x10] sm:$0xff] %v834
        %851 = vst [vmem:[%s302 + $0x18] sm:$0xff] %v835
        %852 = vst [vmem:[%s302 + $0x20] sm:$0xff] %v836
        %853 = vst [vmem:[%s302 + $0x28] sm:$0xff] %v837
        %854 = vst [vmem:[%s302 + $0x30] sm:$0xff] %v838
        %855 = vst [vmem:[%s302 + $0x38] sm:$0xff] %v839
        %856 = vst [vmem:[%s302 + $0x40] sm:$0xff] %v840
        %857 = vst [vmem:[%s302 + $0x48] sm:$0xff] %v841
        %858 = vst [vmem:[%s302 + $0x50] sm:$0xff] %v842
        %859 = vst [vmem:[%s302 + $0x58] sm:$0xff] %v843
        %860 = vst [vmem:[%s302 + $0x60] sm:$0xff] %v844
        %861 = vst [vmem:[%s302 + $0x68] sm:$0xff] %v845
        %862 = vst [vmem:[%s302 + $0x70] sm:$0xff] %v846
        %863 = vst [vmem:[%s302 + $0x78] sm:$0xff] %v847
        %v864 = vsel %vm754, %v832, -inf
        %v865 = vsel %vm754, %v833, -inf
        %v866 = vsel %vm754, %v834, -inf
        %v867 = vsel %vm754, %v835, -inf
        %v868 = vsel %vm754, %v836, -inf
        %v869 = vsel %vm754, %v837, -inf
        %v870 = vsel %vm754, %v838, -inf
        %v871 = vsel %vm754, %v839, -inf
        %v872 = vsel %vm754, %v840, -inf
        %v873 = vsel %vm754, %v841, -inf
        %v874 = vsel %vm754, %v842, -inf
        %v875 = vsel %vm754, %v843, -inf
        %v876 = vsel %vm754, %v844, -inf
        %v877 = vsel %vm754, %v845, -inf
        %v878 = vsel %vm754, %v846, -inf
        %v879 = vsel %vm754, %v847, -inf
        %880 = vmax.xlane.f32.xlu0 %v864
        %v881 = vpop.xlane.xlu0 %880
        %882 = vmax.xlane.f32.xlu0 %v865
        %v883 = vpop.xlane.xlu0 %882
        %884 = vmax.xlane.f32.xlu0 %v866
        %v885 = vpop.xlane.xlu0 %884
        %886 = vmax.xlane.f32.xlu0 %v867
        %v887 = vpop.xlane.xlu0 %886
        %888 = vmax.xlane.f32.xlu0 %v868
        %v889 = vpop.xlane.xlu0 %888
        %890 = vmax.xlane.f32.xlu0 %v869
        %v891 = vpop.xlane.xlu0 %890
        %892 = vmax.xlane.f32.xlu0 %v870
        %v893 = vpop.xlane.xlu0 %892
        %894 = vmax.xlane.f32.xlu0 %v871
        %v895 = vpop.xlane.xlu0 %894
        %896 = vmax.xlane.f32.xlu0 %v872
        %v897 = vpop.xlane.xlu0 %896
        %898 = vmax.xlane.f32.xlu0 %v873
        %v899 = vpop.xlane.xlu0 %898
        %900 = vmax.xlane.f32.xlu0 %v874
        %v901 = vpop.xlane.xlu0 %900
        %902 = vmax.xlane.f32.xlu0 %v875
        %v903 = vpop.xlane.xlu0 %902
        %904 = vmax.xlane.f32.xlu0 %v876
        %v905 = vpop.xlane.xlu0 %904
        %906 = vmax.xlane.f32.xlu0 %v877
        %v907 = vpop.xlane.xlu0 %906
        %908 = vmax.xlane.f32.xlu0 %v878
        %v909 = vpop.xlane.xlu0 %908
        %910 = vmax.xlane.f32.xlu0 %v879
        %v911 = vpop.xlane.xlu0 %910
        %v912 = vsub.f32 %v864, %v881
        %v913 = vsub.f32 %v865, %v883
        %v914 = vsub.f32 %v866, %v885
        %v915 = vsub.f32 %v867, %v887
        %v916 = vsub.f32 %v868, %v889
        %v917 = vsub.f32 %v869, %v891
        %v918 = vsub.f32 %v870, %v893
        %v919 = vsub.f32 %v871, %v895
        %v920 = vsub.f32 %v872, %v897
        %v921 = vsub.f32 %v873, %v899
        %v922 = vsub.f32 %v874, %v901
        %v923 = vsub.f32 %v875, %v903
        %v924 = vsub.f32 %v876, %v905
        %v925 = vsub.f32 %v877, %v907
        %v926 = vsub.f32 %v878, %v909
        %v927 = vsub.f32 %v879, %v911
        %v928 = vmul.f32 %v912, 1.442695
        %v929 = vpow.pop %v928
        %v930 = vmul.f32 %v913, 1.442695
        %v931 = vpow.pop %v930
        %v932 = vmul.f32 %v914, 1.442695
        %v933 = vpow.pop %v932
        %v934 = vmul.f32 %v915, 1.442695
        %v935 = vpow.pop %v934
        %v936 = vmul.f32 %v916, 1.442695
        %v937 = vpow.pop %v936
        %v938 = vmul.f32 %v917, 1.442695
        %v939 = vpow.pop %v938
        %v940 = vmul.f32 %v918, 1.442695
        %v941 = vpow.pop %v940
        %v942 = vmul.f32 %v919, 1.442695
        %v943 = vpow.pop %v942
        %v944 = vmul.f32 %v920, 1.442695
        %v945 = vpow.pop %v944
        %v946 = vmul.f32 %v921, 1.442695
        %v947 = vpow.pop %v946
        %v948 = vmul.f32 %v922, 1.442695
        %v949 = vpow.pop %v948
        %v950 = vmul.f32 %v923, 1.442695
        %v951 = vpow.pop %v950
        %v952 = vmul.f32 %v924, 1.442695
        %v953 = vpow.pop %v952
        %v954 = vmul.f32 %v925, 1.442695
        %v955 = vpow.pop %v954
        %v956 = vmul.f32 %v926, 1.442695
        %v957 = vpow.pop %v956
        %v958 = vmul.f32 %v927, 1.442695
        %v959 = vpow.pop %v958
        %960 = vadd.xlane.f32.xlu0 %v929
        %v961 = vpop.xlane.xlu0 %960
        %962 = vadd.xlane.f32.xlu0 %v931
        %v963 = vpop.xlane.xlu0 %962
        %964 = vadd.xlane.f32.xlu0 %v933
        %v965 = vpop.xlane.xlu0 %964
        %966 = vadd.xlane.f32.xlu0 %v935
        %v967 = vpop.xlane.xlu0 %966
        %968 = vadd.xlane.f32.xlu0 %v937
        %v969 = vpop.xlane.xlu0 %968
        %970 = vadd.xlane.f32.xlu0 %v939
        %v971 = vpop.xlane.xlu0 %970
        %972 = vadd.xlane.f32.xlu0 %v941
        %v973 = vpop.xlane.xlu0 %972
        %974 = vadd.xlane.f32.xlu0 %v943
        %v975 = vpop.xlane.xlu0 %974
        %976 = vadd.xlane.f32.xlu0 %v945
        %v977 = vpop.xlane.xlu0 %976
        %978 = vadd.xlane.f32.xlu0 %v947
        %v979 = vpop.xlane.xlu0 %978
        %980 = vadd.xlane.f32.xlu0 %v949
        %v981 = vpop.xlane.xlu0 %980
        %982 = vadd.xlane.f32.xlu0 %v951
        %v983 = vpop.xlane.xlu0 %982
        %984 = vadd.xlane.f32.xlu0 %v953
        %v985 = vpop.xlane.xlu0 %984
        %986 = vadd.xlane.f32.xlu0 %v955
        %v987 = vpop.xlane.xlu0 %986
        %988 = vadd.xlane.f32.xlu0 %v957
        %v989 = vpop.xlane.xlu0 %988
        %990 = vadd.xlane.f32.xlu0 %v959
        %v991 = vpop.xlane.xlu0 %990
        %v992 = vrcp.pop %v961
        %v993 = vmul.f32 %v929, %v992
        %v994 = vrcp.pop %v963
        %v995 = vmul.f32 %v931, %v994
        %v996 = vrcp.pop %v965
        %v997 = vmul.f32 %v933, %v996
        %v998 = vrcp.pop %v967
        %v999 = vmul.f32 %v935, %v998
        %v1000 = vrcp.pop %v969
        %v1001 = vmul.f32 %v937, %v1000
        %v1002 = vrcp.pop %v971
        %v1003 = vmul.f32 %v939, %v1002
        %v1004 = vrcp.pop %v973
        %v1005 = vmul.f32 %v941, %v1004
        %v1006 = vrcp.pop %v975
        %v1007 = vmul.f32 %v943, %v1006
        %v1008 = vrcp.pop %v977
        %v1009 = vmul.f32 %v945, %v1008
        %v1010 = vrcp.pop %v979
        %v1011 = vmul.f32 %v947, %v1010
        %v1012 = vrcp.pop %v981
        %v1013 = vmul.f32 %v949, %v1012
        %v1014 = vrcp.pop %v983
        %v1015 = vmul.f32 %v951, %v1014
        %v1016 = vrcp.pop %v985
        %v1017 = vmul.f32 %v953, %v1016
        %v1018 = vrcp.pop %v987
        %v1019 = vmul.f32 %v955, %v1018
        %v1020 = vrcp.pop %v989
        %v1021 = vmul.f32 %v957, %v1020
        %v1022 = vrcp.pop %v991
        %v1023 = vmul.f32 %v959, %v1022
        %1024 = vst [vmem:[%s309] sm:$0xff] %v993
        %1025 = vst [vmem:[%s309 + $0x8] sm:$0xff] %v995
        %1026 = vst [vmem:[%s309 + $0x10] sm:$0xff] %v997
        %1027 = vst [vmem:[%s309 + $0x18] sm:$0xff] %v999
        %1028 = vst [vmem:[%s309 + $0x20] sm:$0xff] %v1001
        %1029 = vst [vmem:[%s309 + $0x28] sm:$0xff] %v1003
        %1030 = vst [vmem:[%s309 + $0x30] sm:$0xff] %v1005
        %1031 = vst [vmem:[%s309 + $0x38] sm:$0xff] %v1007
        %1032 = vst [vmem:[%s309 + $0x40] sm:$0xff] %v1009
        %1033 = vst [vmem:[%s309 + $0x48] sm:$0xff] %v1011
        %1034 = vst [vmem:[%s309 + $0x50] sm:$0xff] %v1013
        %1035 = vst [vmem:[%s309 + $0x58] sm:$0xff] %v1015
        %1036 = vst [vmem:[%s309 + $0x60] sm:$0xff] %v1017
        %1037 = vst [vmem:[%s309 + $0x68] sm:$0xff] %v1019
        %1038 = vst [vmem:[%s309 + $0x70] sm:$0xff] %v1021
        %1039 = vst [vmem:[%s309 + $0x78] sm:$0xff] %v1023
        %s1040 = sand.u32 %s146, 1
        %s1041 = scalar_lea.sflag [#allocation4], %s1040
        %s1042 = sand.u32 %s146, 1
        %s1043 = smul.addr %s1042, 128
        %s1044 = scalar_lea.vmem [#allocation8], %s1043
        %s1045 = sand.u32 %s172, 1
        %s1046 = scalar_lea.sflag [#allocation10], %s1045
        %s1047 = sand.u32 %s172, 1
        %s1048 = smul.addr %s1047, 128
        %s1049 = scalar_lea.vmem [#allocation9], %s1048
        // Predicated region
        $region53: #{tpu_custom_call.1} parent=39 // pred_check
          %p1050 = pneg %p156
        $region54: #{tpu_custom_call.1} parent=39 // pred_check_branch
          %1052 = sbr.rel (%p1050) target = $region56
        $region55: #{tpu_custom_call.1} parent=39 // pred_region
          %s1053 = smul.u32 16, %s28
          %s1055 = ssub.s32 2048, 2048
          %1056 = vsyncadd %s1041, %s1055
          %s1057 = smul.addr %s1053, 128
          %s1058 = scalar_lea.hbm %s5, %s1057
          %s1059 = sshll.u32 %s1044, 4
          %s1060 = int_to_ptr.vmem [resolvable:$true] %s1059
          %1065 = dma.vmem_to_hbm [thread:$0]  %s1060, 2048, %s1058, %s1041, 128, 128, 8
        $region56: #{tpu_custom_call.1} parent=39 // pred_fallthru
          _
        // Predicated region
        $region57: #{tpu_custom_call.1} parent=39 // pred_check
          %p1066 = pneg %p182
        $region58: #{tpu_custom_call.1} parent=39 // pred_check_branch
          %1068 = sbr.rel (%p1066) target = $region60
        $region59: #{tpu_custom_call.1} parent=39 // pred_region
          %s1069 = smul.u32 16, %s28
          %s1071 = ssub.s32 2048, 2048
          %1072 = vsyncadd %s1046, %s1071
          %s1073 = smul.addr %s1069, 128
          %s1074 = scalar_lea.hbm %s6, %s1073
          %s1075 = sshll.u32 %s1049, 4
          %s1076 = int_to_ptr.vmem [resolvable:$true] %s1075
          %1081 = dma.vmem_to_hbm [thread:$0]  %s1076, 2048, %s1074, %s1046, 128, 128, 8
        $region60: #{tpu_custom_call.1} parent=39 // pred_fallthru
          _
      $region40: #{tpu_custom_call.1} parent=5 // pred_fallthru
        _
      %p1082 = scmp.le.s32.totalorder 2, %s23
      // Predicated region
      $region61: #{tpu_custom_call.1} parent=5 // pred_check
        %p1083 = pneg %p1082
      $region62: #{tpu_custom_call.1} parent=5 // pred_check_branch
        %1085 = sbr.rel (%p1083) target = $region64
      $region63: #{tpu_custom_call.1} parent=5 // pred_region
        %s1086 = ssub.s32 %s23, 2
        // Predicated region
        $region65: #{tpu_custom_call.1} parent=63 // pred_check
          %p1087 = pneg %p162
        $region66: #{tpu_custom_call.1} parent=63 // pred_check_branch
          %1089 = sbr.rel (%p1087) target = $region68
        $region67: #{tpu_custom_call.1} parent=63 // pred_region
          %s1090 = sand.u32 %s147, 1
          %s1091 = scalar_lea.sflag [#allocation4], %s1090
          %s1092 = sand.u32 %s147, 1
          %s1093 = smul.addr %s1092, 128
          %s1094 = scalar_lea.vmem [#allocation8], %s1093
          %1095 = dma.done %s1091, 2048
        $region68: #{tpu_custom_call.1} parent=63 // pred_fallthru
          _
        // Predicated region
        $region69: #{tpu_custom_call.1} parent=63 // pred_check
          %p1096 = pneg %p188
        $region70: #{tpu_custom_call.1} parent=63 // pred_check_branch
          %1098 = sbr.rel (%p1096) target = $region72
        $region71: #{tpu_custom_call.1} parent=63 // pred_region
          %s1099 = sand.u32 %s173, 1
          %s1100 = scalar_lea.sflag [#allocation10], %s1099
          %s1101 = sand.u32 %s173, 1
          %s1102 = smul.addr %s1101, 128
          %s1103 = scalar_lea.vmem [#allocation9], %s1102
          %1104 = dma.done %s1100, 2048
        $region72: #{tpu_custom_call.1} parent=63 // pred_fallthru
          _
      $region64: #{tpu_custom_call.1} parent=5 // pred_fallthru
        _
    $region6: #{tpu_custom_call.1} parent=1 // loop_footer
      %s27 = sadd.s32 1, %s23
    $region7: #{tpu_custom_call.1} parent=1 // loop_footer_branch
      %22 = sbr.rel target = $region3
    $region8: #{tpu_custom_call.1} parent=1 // loop_exit
      _
    %1105 = vsyncpa [#allocation3], 1
    %s1106 = scalar_lea.sflag [#allocation3], 1
    %1107 = vsyncpa %s1106, 1
    %1108 = vsyncpa [#allocation6], 1
    %1109 = vsyncpa [#allocation4], 1
    %s1110 = scalar_lea.sflag [#allocation4], 1
    %1111 = vsyncpa %s1110, 1
    %1112 = vsyncpa [#allocation10], 1
    %s1113 = scalar_lea.sflag [#allocation10], 1
    %1114 = vsyncpa %s1113, 1

</llo_original>
